<compile_context>
chip_gen: v7x
topology: tpu7x:2x2x1
jax: 0.10.0
libtpu: 0.0.40
codegen_flags: <defaults>
</compile_context>

<pallas_src>
import functools

import jax
import jax.numpy as jnp
from jax.experimental import pallas as pl
from jax.experimental.pallas import tpu as pltpu

_INV_SQRT2 = 0.7071067811865476


def _round_up(x: int, m: int) -> int:
    return (x + m - 1) // m * m


def _cls_head_kernel(x_ref, w1_ref, b1_ref, w2_ref, b2_ref, o_ref, acc_ref):
    # x:   [Bp, H]       (resident)
    # w1:  [tk, H]       tile of W_dense   (PyTorch [out, in] layout)
    # b1:  [1, tk]       tile of b_dense
    # w2:  [Lp, tk]      tile of W_out     (PyTorch [out, in] layout)
    # b2:  [1, Lp]       (resident)
    # o:   [Bp, Lp]
    # acc: [Bp, Lp] f32  scratch accumulator
    k = pl.program_id(0)

    @pl.when(k == 0)
    def _init():
        acc_ref[...] = jnp.zeros_like(acc_ref)

    # First matmul: x @ W1_tile.T  -> [Bp, tk], f32 accumulation on the MXU.
    h = jax.lax.dot_general(
        x_ref[...], w1_ref[...],
        dimension_numbers=(((1,), (1,)), ((), ())),
        preferred_element_type=jnp.float32,
    )
    h = h + b1_ref[...].astype(jnp.float32)

    # Exact (erf-based) GELU in f32, matching transformers get_activation('gelu').
    h = 0.5 * h * (1.0 + jax.lax.erf(h * _INV_SQRT2))

    # Second matmul: h @ W2_tile.T -> accumulate [Bp, Lp] in f32.
    acc_ref[...] += jax.lax.dot_general(
        h.astype(w2_ref.dtype), w2_ref[...],
        dimension_numbers=(((1,), (1,)), ((), ())),
        preferred_element_type=jnp.float32,
    )

    @pl.when(k == pl.num_programs(0) - 1)
    def _finalize():
        o_ref[...] = (acc_ref[...] + b2_ref[...].astype(jnp.float32)).astype(o_ref.dtype)


@functools.partial(jax.jit, static_argnames=("block_k",))
def lol_classification_head(features, w_dense, b_dense, w_out, b_out, *, block_k=512):
    """features: [B, S, H]; w_dense: [H, H] ([out,in]); b_dense: [H];
    w_out: [L, H] ([out,in]); b_out: [L]. Returns [B, L]."""
    B, S, H = features.shape
    L = w_out.shape[0]
    dtype = features.dtype
    itemsize = jnp.dtype(dtype).itemsize

    # Sublane-dense batch, lane-dense labels.
    sub = 8 if itemsize >= 4 else (16 if itemsize == 2 else 32)
    B_pad = _round_up(B, sub)
    L_pad = _round_up(max(L, 128), 128)

    # Reduction-tile over the intermediate hidden dim; keep a single W1 tile
    # around <= 8 MiB so double-buffering fits default scoped VMEM on all gens.
    max_tk_by_vmem = max(128, ((8 * 1024 * 1024) // max(H * itemsize, 1)) // 128 * 128)
    tk = min(block_k, _round_up(H, 128), max_tk_by_vmem)
    H_pad = _round_up(H, tk)
    num_k = H_pad // tk

    # CLS token; pad batch rows (cheap [B, H] op; padded rows are sliced off).
    x = features[:, 0, :]
    if B_pad != B:
        x = jnp.pad(x, ((0, B_pad - B), (0, 0)))

    # Weights kept in PyTorch [out, in] layout; only zero-pad the intermediate
    # dim and num_labels. (Padded intermediate channels: gelu(0)=0 -> no effect;
    # padded label columns are sliced off.) Ideally done once at load time.
    w1 = jnp.pad(w_dense, ((0, H_pad - H), (0, 0))) if H_pad != H else w_dense
    b1 = (jnp.pad(b_dense, (0, H_pad - H)) if H_pad != H else b_dense).reshape(1, H_pad)
    w2 = jnp.pad(w_out, ((0, L_pad - L), (0, H_pad - H)))
    b2 = jnp.pad(b_out, (0, L_pad - L)).reshape(1, L_pad)

    out = pl.pallas_call(
        _cls_head_kernel,
        out_shape=jax.ShapeDtypeStruct((B_pad, L_pad), dtype),
        grid_spec=pltpu.PrefetchScalarGridSpec(
            num_scalar_prefetch=0,
            grid=(num_k,),
            in_specs=[
                pl.BlockSpec((B_pad, H), lambda k: (0, 0)),     # x (resident)
                pl.BlockSpec((tk, H), lambda k: (k, 0)),        # W1 row tile
                pl.BlockSpec((1, tk), lambda k: (0, k)),        # b1 tile
                pl.BlockSpec((L_pad, tk), lambda k: (0, k)),    # W2 col tile
                pl.BlockSpec((1, L_pad), lambda k: (0, 0)),     # b2 (resident)
            ],
            out_specs=pl.BlockSpec((B_pad, L_pad), lambda k: (0, 0)),
            scratch_shapes=[pltpu.VMEM((B_pad, L_pad), jnp.float32)],
        ),
        compiler_params=pltpu.CompilerParams(
            dimension_semantics=("arbitrary",),
            vmem_limit_bytes=64 * 1024 * 1024,
        ),
    )(x, w1, b1, w2, b2)

    return out[:B, :L]


def _reference(features, w_dense, b_dense, w_out, b_out):
    x = features[:, 0, :].astype(jnp.float32)
    h = x @ w_dense.T.astype(jnp.float32) + b_dense.astype(jnp.float32)
    h = 0.5 * h * (1.0 + jax.lax.erf(h * _INV_SQRT2))
    o = h @ w_out.T.astype(jnp.float32) + b_out.astype(jnp.float32)
    return o.astype(features.dtype)


if __name__ == "__main__":
    # Small config: batch=2, seq=8, hidden=32, num_labels=4
    B, S, H, L = 2, 8, 32, 4

    key = jax.random.PRNGKey(0)
    k_feat, k_w1, k_b1, k_w2, k_b2 = jax.random.split(key, 5)

    features = jax.random.normal(k_feat, (B, S, H), dtype=jnp.float32)
    # nn.Linear layout: weights [out, in], biases [out]
    w_dense = jax.random.normal(k_w1, (H, H), dtype=jnp.float32) * 0.05
    b_dense = jax.random.normal(k_b1, (H,), dtype=jnp.float32) * 0.05
    w_out = jax.random.normal(k_w2, (L, H), dtype=jnp.float32) * 0.05
    b_out = jax.random.normal(k_b2, (L,), dtype=jnp.float32) * 0.05

    out = lol_classification_head(features, w_dense, b_dense, w_out, b_out)
    out = jax.block_until_ready(out)

    ref = _reference(features, w_dense, b_dense, w_out, b_out)
    assert out.shape == (B, L), out.shape
    assert jnp.allclose(out, ref, atol=1e-5, rtol=1e-5), "mismatch vs reference"

    print("KERNEL_OK")
</pallas_src>

<mosaic_0001>
module attributes {stable_mosaic.version = 11 : i64} {
  func.func @_cls_head_kernel(%arg0: i32, %arg1: memref<8x32xf32, #tpu.memory_space<vmem>>, %arg2: memref<128x32xf32, #tpu.memory_space<vmem>>, %arg3: memref<1x128xf32, #tpu.memory_space<vmem>>, %arg4: memref<128x128xf32, #tpu.memory_space<vmem>>, %arg5: memref<1x128xf32, #tpu.memory_space<vmem>>, %arg6: memref<8x128xf32, #tpu.memory_space<vmem>>, %arg7: memref<8x128xf32, #tpu.memory_space<vmem>>) attributes {dimension_semantics = [#tpu.dimension_semantics<arbitrary>], iteration_bounds = array<i64: 1>, scalar_prefetch = 0 : i64, scratch_operands = 1 : i64, tpu.core_type = #tpu.core_type<tc>, window_params = [{pipeline_mode = #tpu.pipeline_mode<synchronous>, transform_indices = @transform_0, window_bounds = array<i64: 8, 32>}, {transform_indices = @transform_1, window_bounds = array<i64: 128, 32>}, {transform_indices = @transform_2, window_bounds = array<i64: 1, 128>}, {transform_indices = @transform_3, window_bounds = array<i64: 128, 128>}, {pipeline_mode = #tpu.pipeline_mode<synchronous>, transform_indices = @transform_4, window_bounds = array<i64: 1, 128>}, {pipeline_mode = #tpu.pipeline_mode<synchronous>, transform_indices = @transform_5, window_bounds = array<i64: 8, 128>}]} {
    %c0_i32 = arith.constant 0 : i32
    %0 = arith.cmpi eq, %arg0, %c0_i32 : i32
    %1 = arith.extui %0 : i1 to i32
    %c0_i32_0 = arith.constant 0 : i32
    %2 = arith.cmpi ne, %1, %c0_i32_0 : i32
    scf.if %2 {
      %cst_18 = arith.constant 0.000000e+00 : f32
      %25 = vector.broadcast %cst_18 : f32 to vector<8x128xf32>
      %c0_19 = arith.constant 0 : index
      %c0_20 = arith.constant 0 : index
      %26 = vector.load %arg7[%c0_19, %c0_20] : memref<8x128xf32, #tpu.memory_space<vmem>>, vector<8x128xf32>
      tpu.vector_store %arg7[%c0_19, %c0_20], %25 {strides = array<i32>} : memref<8x128xf32, #tpu.memory_space<vmem>>, vector<8x128xf32>,
    } else {
    }
    %c0 = arith.constant 0 : index
    %c0_1 = arith.constant 0 : index
    %3 = vector.load %arg1[%c0, %c0_1] : memref<8x32xf32, #tpu.memory_space<vmem>>, vector<8x32xf32>
    %c0_2 = arith.constant 0 : index
    %c0_3 = arith.constant 0 : index
    %4 = vector.load %arg2[%c0_2, %c0_3] : memref<128x32xf32, #tpu.memory_space<vmem>>, vector<128x32xf32>
    %cst = arith.constant dense<0.000000e+00> : vector<8x128xf32>
    %5 = tpu.matmul %3, %4, %cst {dimension_numbers = #tpu.dot_dimension_numbers<[1], [1], [0], [0], [0, 0, 1, 0], [], []>} : vector<8x32xf32>, vector<128x32xf32>, vector<8x128xf32> -> vector<8x128xf32>
    %c0_4 = arith.constant 0 : index
    %c0_5 = arith.constant 0 : index
    %6 = vector.load %arg3[%c0_4, %c0_5] : memref<1x128xf32, #tpu.memory_space<vmem>>, vector<1x128xf32>
    %7 = vector.broadcast %6 : vector<1x128xf32> to vector<8x128xf32>
    %8 = arith.addf %5, %7 : vector<8x128xf32>
    %cst_6 = arith.constant 5.000000e-01 : f32
    %9 = vector.broadcast %cst_6 : f32 to vector<8x128xf32>
    %10 = arith.mulf %9, %8 : vector<8x128xf32>
    %cst_7 = arith.constant 0.707106769 : f32
    %11 = vector.broadcast %cst_7 : f32 to vector<8x128xf32>
    %12 = arith.mulf %8, %11 : vector<8x128xf32>
    %13 = math.erf %12 : vector<8x128xf32>
    %cst_8 = arith.constant 1.000000e+00 : f32
    %14 = vector.broadcast %cst_8 : f32 to vector<8x128xf32>
    %15 = arith.addf %14, %13 : vector<8x128xf32>
    %16 = arith.mulf %10, %15 : vector<8x128xf32>
    %c0_9 = arith.constant 0 : index
    %c0_10 = arith.constant 0 : index
    %17 = vector.load %arg7[%c0_9, %c0_10] : memref<8x128xf32, #tpu.memory_space<vmem>>, vector<8x128xf32>
    %c0_11 = arith.constant 0 : index
    %c0_12 = arith.constant 0 : index
    %18 = vector.load %arg4[%c0_11, %c0_12] : memref<128x128xf32, #tpu.memory_space<vmem>>, vector<128x128xf32>
    %cst_13 = arith.constant dense<0.000000e+00> : vector<8x128xf32>
    %19 = tpu.matmul %16, %18, %cst_13 {dimension_numbers = #tpu.dot_dimension_numbers<[1], [1], [0], [0], [0, 0, 1, 0], [], []>} : vector<8x128xf32>, vector<128x128xf32>, vector<8x128xf32> -> vector<8x128xf32>
    %20 = arith.addf %17, %19 : vector<8x128xf32>
    %c0_14 = arith.constant 0 : index
    %c0_15 = arith.constant 0 : index
    %21 = vector.load %arg7[%c0_14, %c0_15] : memref<8x128xf32, #tpu.memory_space<vmem>>, vector<8x128xf32>
    tpu.vector_store %arg7[%c0_14, %c0_15], %20 {strides = array<i32>} : memref<8x128xf32, #tpu.memory_space<vmem>>, vector<8x128xf32>,
    %c0_i32_16 = arith.constant 0 : i32
    %22 = arith.cmpi eq, %arg0, %c0_i32_16 : i32
    %23 = arith.extui %22 : i1 to i32
    %c0_i32_17 = arith.constant 0 : i32
    %24 = arith.cmpi ne, %23, %c0_i32_17 : i32
    scf.if %24 {
      %c0_18 = arith.constant 0 : index
      %c0_19 = arith.constant 0 : index
      %25 = vector.load %arg7[%c0_18, %c0_19] : memref<8x128xf32, #tpu.memory_space<vmem>>, vector<8x128xf32>
      %c0_20 = arith.constant 0 : index
      %c0_21 = arith.constant 0 : index
      %26 = vector.load %arg5[%c0_20, %c0_21] : memref<1x128xf32, #tpu.memory_space<vmem>>, vector<1x128xf32>
      %27 = vector.broadcast %26 : vector<1x128xf32> to vector<8x128xf32>
      %28 = arith.addf %25, %27 : vector<8x128xf32>
      %c0_22 = arith.constant 0 : index
      %c0_23 = arith.constant 0 : index
      %29 = vector.load %arg6[%c0_22, %c0_23] : memref<8x128xf32, #tpu.memory_space<vmem>>, vector<8x128xf32>
      tpu.vector_store %arg6[%c0_22, %c0_23], %28 {strides = array<i32>} : memref<8x128xf32, #tpu.memory_space<vmem>>, vector<8x128xf32>,
    } else {
    }
    return
  }
  func.func @transform_0(%arg0: i32) -> (i32, i32) {
    %c0_i32 = arith.constant 0 : i32
    %c0_i32_0 = arith.constant 0 : i32
    %c0_i32_1 = arith.constant 0 : i32
    return %c0_i32, %c0_i32_0 : i32, i32
  }
  func.func @transform_1(%arg0: i32) -> (i32, i32) {
    %c0_i32 = arith.constant 0 : i32
    %c0_i32_0 = arith.constant 0 : i32
    return %arg0, %c0_i32 : i32, i32
  }
  func.func @transform_2(%arg0: i32) -> (i32, i32) {
    %c0_i32 = arith.constant 0 : i32
    %c0_i32_0 = arith.constant 0 : i32
    return %c0_i32, %arg0 : i32, i32
  }
  func.func @transform_3(%arg0: i32) -> (i32, i32) {
    %c0_i32 = arith.constant 0 : i32
    %c0_i32_0 = arith.constant 0 : i32
    return %c0_i32, %arg0 : i32, i32
  }
  func.func @transform_4(%arg0: i32) -> (i32, i32) {
    %c0_i32 = arith.constant 0 : i32
    %c0_i32_0 = arith.constant 0 : i32
    %c0_i32_1 = arith.constant 0 : i32
    return %c0_i32, %c0_i32_0 : i32, i32
  }
  func.func @transform_5(%arg0: i32) -> (i32, i32) {
    %c0_i32 = arith.constant 0 : i32
    %c0_i32_0 = arith.constant 0 : i32
    %c0_i32_1 = arith.constant 0 : i32
    return %c0_i32, %c0_i32_0 : i32, i32
  }
}

</mosaic_0001>

<llo_original>
// kernel: lol_classification_head.1
$region0: #{lol_classification_head.1}
  #allocation0 [shape = 'u32[]', space=smem, size = 0x4, offset = 0x4, fixed_abs, tag = 'smem constant byte address 0x4 - core index']
  #allocation1 [shape = 'u32[144,128]{1,0:T(1,128)}', space=vmem, size = 0x12000, scoped, tag = 'internal scratch']
  #allocation2 [shape = 'f32[8,128]{1,0:T(8,128)}', space=vmem, size = 0x1000, scoped, tag = 'scratch operand']
  %s0 = inlined_call_operand.hbm [shape: f32[8,32], index: 0, kind: input, shape index: {}]
  %s1 = inlined_call_operand.hbm [shape: f32[128,32], index: 1, kind: input, shape index: {}]
  %s2 = inlined_call_operand.hbm [shape: f32[1,128], index: 2, kind: input, shape index: {}]
  %s3 = inlined_call_operand.hbm [shape: f32[128,128], index: 3, kind: input, shape index: {}]
  %s4 = inlined_call_operand.hbm [shape: f32[1,128], index: 4, kind: input, shape index: {}]
  %s5 = inlined_call_operand.hbm [shape: f32[8,128], index: 5, kind: output, shape index: {}]
  %s6 = sld [smem:[#allocation0]]
  $region58: #{lol_classification_head.1} parent=0
    _
  %s8 = ssub.s32 1, %s6
  %s9 = scalar_select 0, %s8, %s6
  $region1: #{lol_classification_head.1} parent=0
    #allocation3 [shape = 'u8[4096]{0}', space=vmem, size = 0x1000, scoped, tag = 'input window, operand 0, single buffered']
    #allocation4 [shape = 's32[1]{0}', space=sflag, size = 0x4, scoped, tag = 'scoped memory for lol_classification_head.1']
    #allocation5 [shape = 's32[1]{0}', space=sflag, size = 0x4, scoped, tag = 'scoped memory for lol_classification_head.1']
    #allocation6 [shape = 'u8[65536]{0}', space=vmem, size = 0x10000, scoped, tag = 'input window, operand 1, single buffered']
    #allocation7 [shape = 's32[1]{0}', space=sflag, size = 0x4, scoped, tag = 'scoped memory for lol_classification_head.1']
    #allocation8 [shape = 'u8[512]{0}', space=vmem, size = 0x400, scoped, tag = 'input window, operand 2, single buffered']
    #allocation9 [shape = 'u8[65536]{0}', space=vmem, size = 0x10000, scoped, tag = 'input window, operand 3, single buffered']
    #allocation10 [shape = 's32[1]{0}', space=sflag, size = 0x4, scoped, tag = 'scoped memory for lol_classification_head.1']
    #allocation11 [shape = 'u8[512]{0}', space=vmem, size = 0x400, scoped, tag = 'input window, operand 4, single buffered']
    #allocation12 [shape = 'u8[4096]{0}', space=vmem, size = 0x1000, scoped, tag = 'output window, operand 0, single buffered']
    %10 = vsyncpa [#allocation4], 0
    %11 = vsyncpa [#allocation7], 0
    %12 = vsyncpa [#allocation10], 0
    %13 = vsyncpa [#allocation5], 0
    // Predicated region
    $region2: #{lol_classification_head.1} parent=1 // pred_check
      _
    $region3: #{lol_classification_head.1} parent=1 // pred_check_branch
      %15 = sbr.rel (0) target = $region5
    $region4: #{lol_classification_head.1} parent=1 // pred_region
      %s17 = ssub.s32 128, 128
      %18 = vsyncadd [#allocation4], %s17
      %s20 = sshll.u32 [#allocation3], 4
      %s21 = int_to_ptr.vmem [resolvable:$true] %s20
      %23 = dma.hbm_to_vmem [thread:$0]  %s0, 128, %s21, [#allocation4]
    $region5: #{lol_classification_head.1} parent=1 // pred_fallthru
      _
    // Predicated region
    $region6: #{lol_classification_head.1} parent=1 // pred_check
      _
    $region7: #{lol_classification_head.1} parent=1 // pred_check_branch
      %25 = sbr.rel (0) target = $region9
    $region8: #{lol_classification_head.1} parent=1 // pred_region
      %s27 = ssub.s32 2048, 2048
      %28 = vsyncadd [#allocation7], %s27
      %s29 = sshll.u32 [#allocation6], 4
      %s30 = int_to_ptr.vmem [resolvable:$true] %s29
      %35 = dma.hbm_to_vmem [thread:$0]  %s1, 2048, %s30, [#allocation7], 128, 128, 8
    $region9: #{lol_classification_head.1} parent=1 // pred_fallthru
      _
    // Predicated region
    $region10: #{lol_classification_head.1} parent=1 // pred_check
      _
    $region11: #{lol_classification_head.1} parent=1 // pred_check_branch
      %37 = sbr.rel (0) target = $region13
    $region12: #{lol_classification_head.1} parent=1 // pred_region
      %s39 = ssub.s32 16, 16
      %40 = vsyncadd [#allocation7], %s39
      %s42 = sshll.u32 [#allocation8], 4
      %s43 = int_to_ptr.vmem [resolvable:$true] %s42
      %45 = dma.hbm_to_vmem [thread:$0]  %s2, 16, %s43, [#allocation7]
    $region13: #{lol_classification_head.1} parent=1 // pred_fallthru
      _
    // Predicated region
    $region14: #{lol_classification_head.1} parent=1 // pred_check
      _
    $region15: #{lol_classification_head.1} parent=1 // pred_check_branch
      %47 = sbr.rel (0) target = $region17
    $region16: #{lol_classification_head.1} parent=1 // pred_region
      %s49 = ssub.s32 2048, 2048
      %50 = vsyncadd [#allocation10], %s49
      %s51 = sshll.u32 [#allocation9], 4
      %s52 = int_to_ptr.vmem [resolvable:$true] %s51
      %57 = dma.hbm_to_vmem [thread:$0]  %s3, 2048, %s52, [#allocation10], 128, 128, 8
    $region17: #{lol_classification_head.1} parent=1 // pred_fallthru
      _
    // Predicated region
    $region18: #{lol_classification_head.1} parent=1 // pred_check
      _
    $region19: #{lol_classification_head.1} parent=1 // pred_check_branch
      %59 = sbr.rel (0) target = $region21
    $region20: #{lol_classification_head.1} parent=1 // pred_region
      %s61 = ssub.s32 16, 16
      %62 = vsyncadd [#allocation10], %s61
      %s64 = sshll.u32 [#allocation11], 4
      %s65 = int_to_ptr.vmem [resolvable:$true] %s64
      %67 = dma.hbm_to_vmem [thread:$0]  %s4, 16, %s65, [#allocation10]
    $region21: #{lol_classification_head.1} parent=1 // pred_fallthru
      _
    // Predicated region
    $region22: #{lol_classification_head.1} parent=1 // pred_check
      _
    $region23: #{lol_classification_head.1} parent=1 // pred_check_branch
      %69 = sbr.rel (0) target = $region25
    $region24: #{lol_classification_head.1} parent=1 // pred_region
      %70 = dma.done [#allocation4], 128
    $region25: #{lol_classification_head.1} parent=1 // pred_fallthru
      _
    // Predicated region
    $region26: #{lol_classification_head.1} parent=1 // pred_check
      _
    $region27: #{lol_classification_head.1} parent=1 // pred_check_branch
      %72 = sbr.rel (0) target = $region29
    $region28: #{lol_classification_head.1} parent=1 // pred_region
      %73 = dma.done [#allocation7], 2048
    $region29: #{lol_classification_head.1} parent=1 // pred_fallthru
      _
    // Predicated region
    $region30: #{lol_classification_head.1} parent=1 // pred_check
      _
    $region31: #{lol_classification_head.1} parent=1 // pred_check_branch
      %75 = sbr.rel (0) target = $region33
    $region32: #{lol_classification_head.1} parent=1 // pred_region
      %76 = dma.done [#allocation7], 16
    $region33: #{lol_classification_head.1} parent=1 // pred_fallthru
      _
    // Predicated region
    $region34: #{lol_classification_head.1} parent=1 // pred_check
      _
    $region35: #{lol_classification_head.1} parent=1 // pred_check_branch
      %78 = sbr.rel (0) target = $region37
    $region36: #{lol_classification_head.1} parent=1 // pred_region
      %79 = dma.done [#allocation10], 2048
    $region37: #{lol_classification_head.1} parent=1 // pred_fallthru
      _
    // Predicated region
    $region38: #{lol_classification_head.1} parent=1 // pred_check
      _
    $region39: #{lol_classification_head.1} parent=1 // pred_check_branch
      %81 = sbr.rel (0) target = $region41
    $region40: #{lol_classification_head.1} parent=1 // pred_region
      %82 = dma.done [#allocation10], 16
    $region41: #{lol_classification_head.1} parent=1 // pred_fallthru
      _
    %p83 = scmp.eq.s32.totalorder 0, 0
    // Predicated region
    $region42: #{lol_classification_head.1} parent=1 // pred_check
      %p84 = pneg %p83
    $region43: #{lol_classification_head.1} parent=1 // pred_check_branch
      %86 = sbr.rel (%p84) target = $region45
    $region44: #{lol_classification_head.1} parent=1 // pred_region
      %87 = vst [vmem:[#allocation2] sm:$0xff] 0.0
    $region45: #{lol_classification_head.1} parent=1 // pred_fallthru
      _
    %v88 = vld [vmem:[#allocation3] sm:$0xff]
    %v89 = vld [vmem:[#allocation6] sm:$0xff]
    %v90 = vld [vmem:[#allocation6 + $0x8] sm:$0xff]
    %v91 = vld [vmem:[#allocation6 + $0x10] sm:$0xff]
    %v92 = vld [vmem:[#allocation6 + $0x18] sm:$0xff]
    %v93 = vld [vmem:[#allocation6 + $0x20] sm:$0xff]
    %v94 = vld [vmem:[#allocation6 + $0x28] sm:$0xff]
    %v95 = vld [vmem:[#allocation6 + $0x30] sm:$0xff]
    %v96 = vld [vmem:[#allocation6 + $0x38] sm:$0xff]
    %v97 = vld [vmem:[#allocation6 + $0x40] sm:$0xff]
    %v98 = vld [vmem:[#allocation6 + $0x48] sm:$0xff]
    %v99 = vld [vmem:[#allocation6 + $0x50] sm:$0xff]
    %v100 = vld [vmem:[#allocation6 + $0x58] sm:$0xff]
    %v101 = vld [vmem:[#allocation6 + $0x60] sm:$0xff]
    %v102 = vld [vmem:[#allocation6 + $0x68] sm:$0xff]
    %v103 = vld [vmem:[#allocation6 + $0x70] sm:$0xff]
    %v104 = vld [vmem:[#allocation6 + $0x78] sm:$0xff]
    %v105 = vld [vmem:[#allocation8] sm:$0x1]
    %v107 = vlaneseq
    %v108 = vshrl.u32 %v107, 7
    %v109 = vsub.s32 0, %v108
    %v110 = vrot.slane %v105, %v109
    %vm112 = vcmask 261120
    %v114 = vsel %vm112, %v88, 0
    %v117 = vsel %vm112, %v89, 0
    %v120 = vsel %vm112, %v90, 0
    %v123 = vsel %vm112, %v91, 0
    %v126 = vsel %vm112, %v92, 0
    %v129 = vsel %vm112, %v93, 0
    %v132 = vsel %vm112, %v94, 0
    %v135 = vsel %vm112, %v95, 0
    %v138 = vsel %vm112, %v96, 0
    %v141 = vsel %vm112, %v97, 0
    %v144 = vsel %vm112, %v98, 0
    %v147 = vsel %vm112, %v99, 0
    %v150 = vsel %vm112, %v100, 0
    %v153 = vsel %vm112, %v101, 0
    %v156 = vsel %vm112, %v102, 0
    %v159 = vsel %vm112, %v103, 0
    %v162 = vsel %vm112, %v104, 0
    %164 = vmatprep.subr.mxu0 0.0
    %165 = vmatpush1.xpose.msra.mxu0 %v117
    %166 = vmatprep.subr.mxu0 0.0
    %167 = vmatpush1.xpose.msra.mxu0 %v120
    %168 = vmatprep.subr.mxu0 0.0
    %169 = vmatpush1.xpose.msra.mxu0 %v123
    %170 = vmatprep.subr.mxu0 0.0
    %171 = vmatpush1.xpose.msra.mxu0 %v126
    %172 = vmatprep.subr.mxu0 0.0
    %173 = vmatpush1.xpose.msra.mxu0 %v129
    %174 = vmatprep.subr.mxu0 0.0
    %175 = vmatpush1.xpose.msra.mxu0 %v132
    %176 = vmatprep.subr.mxu0 0.0
    %177 = vmatpush1.xpose.msra.mxu0 %v135
    %178 = vmatprep.subr.mxu0 0.0
    %179 = vmatpush1.xpose.msra.mxu0 %v138
    %180 = vmatprep.subr.mxu0 0.0
    %181 = vmatpush1.xpose.msra.mxu0 %v141
    %182 = vmatprep.subr.mxu0 0.0
    %183 = vmatpush1.xpose.msra.mxu0 %v144
    %184 = vmatprep.subr.mxu0 0.0
    %185 = vmatpush1.xpose.msra.mxu0 %v147
    %186 = vmatprep.subr.mxu0 0.0
    %187 = vmatpush1.xpose.msra.mxu0 %v150
    %188 = vmatprep.subr.mxu0 0.0
    %189 = vmatpush1.xpose.msra.mxu0 %v153
    %190 = vmatprep.subr.mxu0 0.0
    %191 = vmatpush1.xpose.msra.mxu0 %v156
    %192 = vmatprep.subr.mxu0 0.0
    %193 = vmatpush1.xpose.msra.mxu0 %v159
    %194 = vmatprep.subr.mxu0 0.0
    %195 = vmatpush1.xpose.msra.mxu0 %v162
    %196 = vmatprep.subr.mxu0 0.0
    %197 = vmatpush1.xpose.msra.mxu0 0.0
    %198 = vmatprep.subr.mxu0 0.0
    %199 = vmatpush1.xpose.msra.mxu0 0.0
    %200 = vmatprep.subr.mxu0 0.0
    %201 = vmatpush1.xpose.msra.mxu0 0.0
    %202 = vmatprep.subr.mxu0 0.0
    %203 = vmatpush1.xpose.msra.mxu0 0.0
    %204 = vmatprep.subr.mxu0 0.0
    %205 = vmatpush1.xpose.msra.mxu0 0.0
    %206 = vmatprep.subr.mxu0 0.0
    %207 = vmatpush1.xpose.msra.mxu0 0.0
    %208 = vmatprep.subr.mxu0 0.0
    %209 = vmatpush1.xpose.msra.mxu0 0.0
    %210 = vmatprep.subr.mxu0 0.0
    %211 = vmatpush1.xpose.msra.mxu0 0.0
    %212 = vmatprep.subr.mxu0 0.0
    %213 = vmatpush1.xpose.msra.mxu0 0.0
    %214 = vmatprep.subr.mxu0 0.0
    %215 = vmatpush1.xpose.msra.mxu0 0.0
    %216 = vmatprep.subr.mxu0 0.0
    %217 = vmatpush1.xpose.msra.mxu0 0.0
    %218 = vmatprep.subr.mxu0 0.0
    %219 = vmatpush1.xpose.msra.mxu0 0.0
    %220 = vmatprep.subr.mxu0 0.0
    %221 = vmatpush1.xpose.msra.mxu0 0.0
    %222 = vmatprep.subr.mxu0 0.0
    %223 = vmatpush1.xpose.msra.mxu0 0.0
    %224 = vmatprep.subr.mxu0 0.0
    %225 = vmatpush1.xpose.msra.mxu0 0.0
    %226 = vmatprep.subr.mxu0 0.0
    %227 = vmatpush1.xpose.msra.mxu0 0.0
    %228 = vmatprep.mubr.f32.mxu0 0.0
    %229 = vmatmul.mubr.f32.gmra.mrb[0].mxu0 %v114
    %v230 = vpop.f32.mrb[0].mxu0
    %v231 = vadd.f32 %v110, %v230
    %v232 = vpop.f32.mrb[0].mxu0
    %233 = vdwg.mxu0
    %v234 = vmul.f32 %v231, 0.5
    %v235 = vmul.f32 %v231, 0.70710677
    %v236 = verf.f32.pop %v235
    %v237 = vadd.f32 %v236, 1.0
    %v238 = vmul.f32 %v234, %v237
    %v239 = vld [vmem:[#allocation2] sm:$0xff]
    %v240 = vld [vmem:[#allocation9] sm:$0xff]
    %v241 = vld [vmem:[#allocation9 + $0x8] sm:$0xff]
    %v242 = vld [vmem:[#allocation9 + $0x10] sm:$0xff]
    %v243 = vld [vmem:[#allocation9 + $0x18] sm:$0xff]
    %v244 = vld [vmem:[#allocation9 + $0x20] sm:$0xff]
    %v245 = vld [vmem:[#allocation9 + $0x28] sm:$0xff]
    %v246 = vld [vmem:[#allocation9 + $0x30] sm:$0xff]
    %v247 = vld [vmem:[#allocation9 + $0x38] sm:$0xff]
    %v248 = vld [vmem:[#allocation9 + $0x40] sm:$0xff]
    %v249 = vld [vmem:[#allocation9 + $0x48] sm:$0xff]
    %v250 = vld [vmem:[#allocation9 + $0x50] sm:$0xff]
    %v251 = vld [vmem:[#allocation9 + $0x58] sm:$0xff]
    %v252 = vld [vmem:[#allocation9 + $0x60] sm:$0xff]
    %v253 = vld [vmem:[#allocation9 + $0x68] sm:$0xff]
    %v254 = vld [vmem:[#allocation9 + $0x70] sm:$0xff]
    %v255 = vld [vmem:[#allocation9 + $0x78] sm:$0xff]
    %256 = vmatprep.subr.mxu0 0.0
    %257 = vmatpush1.xpose.msra.mxu0 %v240
    %258 = vmatprep.subr.mxu0 0.0
    %259 = vmatpush1.xpose.msra.mxu0 %v241
    %260 = vmatprep.subr.mxu0 0.0
    %261 = vmatpush1.xpose.msra.mxu0 %v242
    %262 = vmatprep.subr.mxu0 0.0
    %263 = vmatpush1.xpose.msra.mxu0 %v243
    %264 = vmatprep.subr.mxu0 0.0
    %265 = vmatpush1.xpose.msra.mxu0 %v244
    %266 = vmatprep.subr.mxu0 0.0
    %267 = vmatpush1.xpose.msra.mxu0 %v245
    %268 = vmatprep.subr.mxu0 0.0
    %269 = vmatpush1.xpose.msra.mxu0 %v246
    %270 = vmatprep.subr.mxu0 0.0
    %271 = vmatpush1.xpose.msra.mxu0 %v247
    %272 = vmatprep.subr.mxu0 0.0
    %273 = vmatpush1.xpose.msra.mxu0 %v248
    %274 = vmatprep.subr.mxu0 0.0
    %275 = vmatpush1.xpose.msra.mxu0 %v249
    %276 = vmatprep.subr.mxu0 0.0
    %277 = vmatpush1.xpose.msra.mxu0 %v250
    %278 = vmatprep.subr.mxu0 0.0
    %279 = vmatpush1.xpose.msra.mxu0 %v251
    %280 = vmatprep.subr.mxu0 0.0
    %281 = vmatpush1.xpose.msra.mxu0 %v252
    %282 = vmatprep.subr.mxu0 0.0
    %283 = vmatpush1.xpose.msra.mxu0 %v253
    %284 = vmatprep.subr.mxu0 0.0
    %285 = vmatpush1.xpose.msra.mxu0 %v254
    %286 = vmatprep.subr.mxu0 0.0
    %287 = vmatpush1.xpose.msra.mxu0 %v255
    %288 = vmatprep.subr.mxu0 0.0
    %289 = vmatpush1.xpose.msra.mxu0 0.0
    %290 = vmatprep.subr.mxu0 0.0
    %291 = vmatpush1.xpose.msra.mxu0 0.0
    %292 = vmatprep.subr.mxu0 0.0
    %293 = vmatpush1.xpose.msra.mxu0 0.0
    %294 = vmatprep.subr.mxu0 0.0
    %295 = vmatpush1.xpose.msra.mxu0 0.0
    %296 = vmatprep.subr.mxu0 0.0
    %297 = vmatpush1.xpose.msra.mxu0 0.0
    %298 = vmatprep.subr.mxu0 0.0
    %299 = vmatpush1.xpose.msra.mxu0 0.0
    %300 = vmatprep.subr.mxu0 0.0
    %301 = vmatpush1.xpose.msra.mxu0 0.0
    %302 = vmatprep.subr.mxu0 0.0
    %303 = vmatpush1.xpose.msra.mxu0 0.0
    %304 = vmatprep.subr.mxu0 0.0
    %305 = vmatpush1.xpose.msra.mxu0 0.0
    %306 = vmatprep.subr.mxu0 0.0
    %307 = vmatpush1.xpose.msra.mxu0 0.0
    %308 = vmatprep.subr.mxu0 0.0
    %309 = vmatpush1.xpose.msra.mxu0 0.0
    %310 = vmatprep.subr.mxu0 0.0
    %311 = vmatpush1.xpose.msra.mxu0 0.0
    %312 = vmatprep.subr.mxu0 0.0
    %313 = vmatpush1.xpose.msra.mxu0 0.0
    %314 = vmatprep.subr.mxu0 0.0
    %315 = vmatpush1.xpose.msra.mxu0 0.0
    %316 = vmatprep.subr.mxu0 0.0
    %317 = vmatpush1.xpose.msra.mxu0 0.0
    %318 = vmatprep.subr.mxu0 0.0
    %319 = vmatpush1.xpose.msra.mxu0 0.0
    %320 = vmatprep.mubr.f32.mxu0 0.0
    %321 = vmatmul.mubr.f32.gmra.mrb[0].mxu0 %v238
    %v322 = vpop.f32.mrb[0].mxu0
    %v323 = vadd.f32 0.0, %v322
    %v324 = vpop.f32.mrb[0].mxu0
    %325 = vdwg.mxu0
    %v326 = vadd.f32 %v239, %v323
    %327 = vst [vmem:[#allocation2] sm:$0xff] %v326
    // Predicated region
    $region46: #{lol_classification_head.1} parent=1 // pred_check
      %p328 = pneg %p83
    $region47: #{lol_classification_head.1} parent=1 // pred_check_branch
      %330 = sbr.rel (%p328) target = $region49
    $region48: #{lol_classification_head.1} parent=1 // pred_region
      %v331 = vld [vmem:[#allocation2] sm:$0xff]
      %v332 = vld [vmem:[#allocation11] sm:$0x1]
      %v334 = vlaneseq
      %v335 = vshrl.u32 %v334, 7
      %v336 = vsub.s32 0, %v335
      %v337 = vrot.slane %v332, %v336
      %v339 = vadd.f32 %v331, %v337
      %340 = vst [vmem:[#allocation12] sm:$0xff] %v339
    $region49: #{lol_classification_head.1} parent=1 // pred_fallthru
      _
    // Predicated region
    $region50: #{lol_classification_head.1} parent=1 // pred_check
      _
    $region51: #{lol_classification_head.1} parent=1 // pred_check_branch
      %342 = sbr.rel (0) target = $region53
    $region52: #{lol_classification_head.1} parent=1 // pred_region
      %s344 = ssub.s32 128, 128
      %345 = vsyncadd [#allocation5], %s344
      %s347 = sshll.u32 [#allocation12], 4
      %s348 = int_to_ptr.vmem [resolvable:$true] %s347
      %350 = dma.vmem_to_hbm [thread:$0]  %s348, 128, %s5, [#allocation5]
    $region53: #{lol_classification_head.1} parent=1 // pred_fallthru
      _
    // Predicated region
    $region54: #{lol_classification_head.1} parent=1 // pred_check
      _
    $region55: #{lol_classification_head.1} parent=1 // pred_check_branch
      %352 = sbr.rel (0) target = $region57
    $region56: #{lol_classification_head.1} parent=1 // pred_region
      %353 = dma.done [#allocation5], 128
    $region57: #{lol_classification_head.1} parent=1 // pred_fallthru
      _
    %354 = vsyncpa [#allocation4], 1
    %355 = vsyncpa [#allocation7], 1
    %356 = vsyncpa [#allocation10], 1
    %357 = vsyncpa [#allocation5], 1

</llo_original>
